<compile_context>
chip_gen: v5e
topology: v5e:2x2
jax: 0.10.0
libtpu: 0.0.40
codegen_flags: <defaults>
</compile_context>

<pallas_src>
import functools
import math

import jax
import jax.numpy as jnp
from jax import lax
from jax.experimental import pallas as pl
from jax.experimental.pallas import tpu as pltpu


def _maxpool_kernel(x_ref, o_ref, *, kk):
    # x_ref: (kk, TR, TP) -- all k*k window taps for this output tile.
    # o_ref: (TR, TP)     -- pooled output tile.
    m = x_ref[0]
    for j in range(1, kk):           # kk is small (9); unrolled element-wise max
        m = jnp.maximum(m, x_ref[j])
    o_ref[...] = m


def maxpool2d_ceil(x, kernel_size=3, *, tile_rows=128, tile_cols=1024):
    """MaxPool2d(kernel_size, stride=kernel_size, ceil_mode=True) on NCHW."""
    k = kernel_size
    N, C, H, W = x.shape
    Ho = -(-H // k)  # ceil_mode output sizes (stride == k, no padding)
    Wo = -(-W // k)
    Hp, Wp = Ho * k, Wo * k

    # Pad only the ragged ceil_mode tail (<= k-1 rows/cols) with a value that
    # can never win the max; skipped entirely when H, W are already aligned.
    if (Hp, Wp) != (H, W):
        if jnp.issubdtype(x.dtype, jnp.floating):
            pad_val = float("-inf")
        else:
            pad_val = int(jnp.iinfo(x.dtype).min)
        x = jnp.pad(
            x,
            ((0, 0), (0, 0), (0, Hp - H), (0, Wp - W)),
            constant_values=pad_val,
        )

    kk = k * k
    R = N * C
    P = Ho * Wo

    # (N, C, Ho, k, Wo, k) -> (k, k, N, C, Ho, Wo): a single XLA transpose that
    # puts the k*k window taps on the leading axis and the lane-dense Ho*Wo on
    # the minor axis.  Then a contiguous reshape to (kk, R, P).
    xr = (
        x.reshape(N, C, Ho, k, Wo, k)
        .transpose(3, 5, 0, 1, 2, 4)
        .reshape(kk, R, P)
    )

    # Block sizes: either the full dim (always legal) or an aligned tile
    # (tile_rows multiple of 8, tile_cols multiple of 128).
    tr = R if R <= tile_rows else tile_rows
    tp = P if P <= tile_cols else tile_cols

    out = pl.pallas_call(
        functools.partial(_maxpool_kernel, kk=kk),
        out_shape=jax.ShapeDtypeStruct((R, P), x.dtype),
        grid=(pl.cdiv(R, tr), pl.cdiv(P, tp)),
        in_specs=[pl.BlockSpec((kk, tr, tp), lambda i, j: (0, i, j))],
        out_specs=pl.BlockSpec((tr, tp), lambda i, j: (i, j)),
        compiler_params=pltpu.CompilerParams(
            dimension_semantics=("parallel", "parallel"),
        ),
    )(xr)
    return out.reshape(N, C, Ho, Wo)


def _reference_maxpool(x, k=3):
    """Pure-JAX reference (lax.reduce_window) for verification."""
    N, C, H, W = x.shape
    Ho = -(-H // k)
    Wo = -(-W // k)
    return lax.reduce_window(
        x,
        -jnp.inf,
        lax.max,
        window_dimensions=(1, 1, k, k),
        window_strides=(1, 1, k, k),
        padding=((0, 0), (0, 0), (0, Ho * k - H), (0, Wo * k - W)),
    )


if __name__ == "__main__":
    # Exact input from the PyTorch script: 5x5 -> (1, 1, 5, 5) NCHW.
    inp = jnp.array(
        [[1, 2, 0, 3, 1],
         [0, 1, 2, 3, 1],
         [1, 2, 1, 0, 0],
         [5, 2, 3, 1, 1],
         [2, 1, 0, 1, 1]],
        dtype=jnp.float32,
    )
    x = inp.reshape(-1, 1, 5, 5)
    out = jax.block_until_ready(maxpool2d_ceil(x, kernel_size=3))
    expected = jnp.array([[[[2.0, 3.0], [5.0, 1.0]]]], dtype=jnp.float32)
    assert out.shape == (1, 1, 2, 2), out.shape
    assert jnp.array_equal(out, expected), out

    # Deterministic random check (exercises ceil_mode padding + multi-channel).
    key = jax.random.PRNGKey(0)
    x2 = jax.random.normal(key, (2, 4, 16, 16), dtype=jnp.float32)
    out2 = jax.block_until_ready(maxpool2d_ceil(x2, kernel_size=3))
    ref2 = _reference_maxpool(x2, k=3)
    assert out2.shape == (2, 4, 6, 6), out2.shape
    assert jnp.array_equal(out2, ref2), (out2, ref2)

    print("KERNEL_OK")
</pallas_src>

<mosaic_0001>
module attributes {stable_mosaic.version = 11 : i64} {
  func.func @_maxpool_kernel(%arg0: i32, %arg1: i32, %arg2: memref<9x1x4xf32, #tpu.memory_space<vmem>>, %arg3: memref<1x4xf32, #tpu.memory_space<vmem>>) attributes {dimension_semantics = [#tpu.dimension_semantics<parallel>, #tpu.dimension_semantics<parallel>], iteration_bounds = array<i64: 1, 1>, scalar_prefetch = 0 : i64, scratch_operands = 0 : i64, tpu.core_type = #tpu.core_type<tc>, window_params = [{transform_indices = @transform_0, window_bounds = array<i64: 9, 1, 4>}, {transform_indices = @transform_1, window_bounds = array<i64: 1, 4>}]} {
    %c0 = arith.constant 0 : index
    %c0_0 = arith.constant 0 : index
    %c0_1 = arith.constant 0 : index
    %0 = vector.load %arg2[%c0, %c0_0, %c0_1] : memref<9x1x4xf32, #tpu.memory_space<vmem>>, vector<1x1x4xf32>
    %1 = vector.shape_cast %0 : vector<1x1x4xf32> to vector<1x4xf32>
    %c1 = arith.constant 1 : index
    %c0_2 = arith.constant 0 : index
    %c0_3 = arith.constant 0 : index
    %2 = vector.load %arg2[%c1, %c0_2, %c0_3] : memref<9x1x4xf32, #tpu.memory_space<vmem>>, vector<1x1x4xf32>
    %3 = vector.shape_cast %2 : vector<1x1x4xf32> to vector<1x4xf32>
    %4 = arith.maximumf %1, %3 : vector<1x4xf32>
    %c2 = arith.constant 2 : index
    %c0_4 = arith.constant 0 : index
    %c0_5 = arith.constant 0 : index
    %5 = vector.load %arg2[%c2, %c0_4, %c0_5] : memref<9x1x4xf32, #tpu.memory_space<vmem>>, vector<1x1x4xf32>
    %6 = vector.shape_cast %5 : vector<1x1x4xf32> to vector<1x4xf32>
    %7 = arith.maximumf %4, %6 : vector<1x4xf32>
    %c3 = arith.constant 3 : index
    %c0_6 = arith.constant 0 : index
    %c0_7 = arith.constant 0 : index
    %8 = vector.load %arg2[%c3, %c0_6, %c0_7] : memref<9x1x4xf32, #tpu.memory_space<vmem>>, vector<1x1x4xf32>
    %9 = vector.shape_cast %8 : vector<1x1x4xf32> to vector<1x4xf32>
    %10 = arith.maximumf %7, %9 : vector<1x4xf32>
    %c4 = arith.constant 4 : index
    %c0_8 = arith.constant 0 : index
    %c0_9 = arith.constant 0 : index
    %11 = vector.load %arg2[%c4, %c0_8, %c0_9] : memref<9x1x4xf32, #tpu.memory_space<vmem>>, vector<1x1x4xf32>
    %12 = vector.shape_cast %11 : vector<1x1x4xf32> to vector<1x4xf32>
    %13 = arith.maximumf %10, %12 : vector<1x4xf32>
    %c5 = arith.constant 5 : index
    %c0_10 = arith.constant 0 : index
    %c0_11 = arith.constant 0 : index
    %14 = vector.load %arg2[%c5, %c0_10, %c0_11] : memref<9x1x4xf32, #tpu.memory_space<vmem>>, vector<1x1x4xf32>
    %15 = vector.shape_cast %14 : vector<1x1x4xf32> to vector<1x4xf32>
    %16 = arith.maximumf %13, %15 : vector<1x4xf32>
    %c6 = arith.constant 6 : index
    %c0_12 = arith.constant 0 : index
    %c0_13 = arith.constant 0 : index
    %17 = vector.load %arg2[%c6, %c0_12, %c0_13] : memref<9x1x4xf32, #tpu.memory_space<vmem>>, vector<1x1x4xf32>
    %18 = vector.shape_cast %17 : vector<1x1x4xf32> to vector<1x4xf32>
    %19 = arith.maximumf %16, %18 : vector<1x4xf32>
    %c7 = arith.constant 7 : index
    %c0_14 = arith.constant 0 : index
    %c0_15 = arith.constant 0 : index
    %20 = vector.load %arg2[%c7, %c0_14, %c0_15] : memref<9x1x4xf32, #tpu.memory_space<vmem>>, vector<1x1x4xf32>
    %21 = vector.shape_cast %20 : vector<1x1x4xf32> to vector<1x4xf32>
    %22 = arith.maximumf %19, %21 : vector<1x4xf32>
    %c8 = arith.constant 8 : index
    %c0_16 = arith.constant 0 : index
    %c0_17 = arith.constant 0 : index
    %23 = vector.load %arg2[%c8, %c0_16, %c0_17] : memref<9x1x4xf32, #tpu.memory_space<vmem>>, vector<1x1x4xf32>
    %24 = vector.shape_cast %23 : vector<1x1x4xf32> to vector<1x4xf32>
    %25 = arith.maximumf %22, %24 : vector<1x4xf32>
    %c0_18 = arith.constant 0 : index
    %c0_19 = arith.constant 0 : index
    %26 = vector.load %arg3[%c0_18, %c0_19] : memref<1x4xf32, #tpu.memory_space<vmem>>, vector<1x4xf32>
    tpu.vector_store %arg3[%c0_18, %c0_19], %25 {strides = array<i32>} : memref<1x4xf32, #tpu.memory_space<vmem>>, vector<1x4xf32>,
    return
  }
  func.func @transform_0(%arg0: i32, %arg1: i32) -> (i32, i32, i32) {
    %c0_i32 = arith.constant 0 : i32
    %c0_i32_0 = arith.constant 0 : i32
    return %c0_i32, %arg0, %arg1 : i32, i32, i32
  }
  func.func @transform_1(%arg0: i32, %arg1: i32) -> (i32, i32) {
    %c0_i32 = arith.constant 0 : i32
    return %arg0, %arg1 : i32, i32
  }
}

</mosaic_0001>

<llo_original>
// kernel: tpu_custom_call.1
$region0: #{tpu_custom_call.1}
  #allocation0 [shape = 'u32[]', space=smem, size = 0x4, offset = 0x4, fixed_abs, tag = 'smem constant byte address 0x4 - core index']
  #allocation1 [shape = 'u32[72,128]{1,0:T(1,128)}', space=vmem, size = 0x9000, scoped, tag = 'internal scratch']
  %s0 = inlined_call_operand.vmem [shape: f32[9,1,4], index: 0, kind: input, shape index: {}]
  %s1 = inlined_call_operand.hbm [shape: f32[1,4], index: 1, kind: output, shape index: {}]
  %s2 = sld [smem:[#allocation0]]
  $region14: #{tpu_custom_call.1} parent=0
    _
  %s4 = ssub.s32 1, %s2
  %s5 = scalar_select 0, %s4, %s2
  $region1: #{tpu_custom_call.1} parent=0
    #allocation2 [shape = 'u8[512]{0}', space=vmem, size = 0x400, scoped, tag = 'output window, operand 0, single buffered']
    #allocation3 [shape = 's32[1]{0}', space=sflag, size = 0x4, scoped, tag = 'scoped memory for tpu_custom_call.1']
    %6 = vsyncpa [#allocation3], 0
    // Predicated region
    $region2: #{tpu_custom_call.1} parent=1 // pred_check
      _
    $region3: #{tpu_custom_call.1} parent=1 // pred_check_branch
      %8 = sbr.rel (0) target = $region5
    $region4: #{tpu_custom_call.1} parent=1 // pred_region
      _
    $region5: #{tpu_custom_call.1} parent=1 // pred_fallthru
      _
    %v9 = vld [vmem:[%s0] sm:$0x1]
    %s10 = scalar_lea.vmem %s0, 1
    %v11 = vld [vmem:[%s10] sm:$0x1]
    %v12 = vmax.f32 %v9, %v11
    %s13 = scalar_lea.vmem %s0, 2
    %v14 = vld [vmem:[%s13] sm:$0x1]
    %v15 = vmax.f32 %v12, %v14
    %s16 = scalar_lea.vmem %s0, 3
    %v17 = vld [vmem:[%s16] sm:$0x1]
    %v18 = vmax.f32 %v15, %v17
    %s19 = scalar_lea.vmem %s0, 4
    %v20 = vld [vmem:[%s19] sm:$0x1]
    %v21 = vmax.f32 %v18, %v20
    %s22 = scalar_lea.vmem %s0, 5
    %v23 = vld [vmem:[%s22] sm:$0x1]
    %v24 = vmax.f32 %v21, %v23
    %s25 = scalar_lea.vmem %s0, 6
    %v26 = vld [vmem:[%s25] sm:$0x1]
    %v27 = vmax.f32 %v24, %v26
    %s28 = scalar_lea.vmem %s0, 7
    %v29 = vld [vmem:[%s28] sm:$0x1]
    %v30 = vmax.f32 %v27, %v29
    %s31 = scalar_lea.vmem %s0, 8
    %v32 = vld [vmem:[%s31] sm:$0x1]
    %v33 = vmax.f32 %v30, %v32
    %vm34 = vcmask 24576
    %35 = vst.msk [vmem:[#allocation2] sm:$0x1] %vm34, %v33
    // Predicated region
    $region6: #{tpu_custom_call.1} parent=1 // pred_check
      _
    $region7: #{tpu_custom_call.1} parent=1 // pred_check_branch
      %37 = sbr.rel (0) target = $region9
    $region8: #{tpu_custom_call.1} parent=1 // pred_region
      %39 = vsyncadd [#allocation3], 0
      %s41 = sshll.u32 [#allocation2], 4
      %s42 = int_to_ptr.vmem [resolvable:$true] %s41
      %s43 = sshll.u32 %s1, 4
      %s44 = int_to_ptr.hbm [resolvable:$true] %s43
      %46 = dma.vmem_to_hbm [thread:$0]  %s42, 16, %s44, [#allocation3]
    $region9: #{tpu_custom_call.1} parent=1 // pred_fallthru
      _
    // Predicated region
    $region10: #{tpu_custom_call.1} parent=1 // pred_check
      _
    $region11: #{tpu_custom_call.1} parent=1 // pred_check_branch
      %48 = sbr.rel (0) target = $region13
    $region12: #{tpu_custom_call.1} parent=1 // pred_region
      %50 = dma.done [#allocation3], 16
    $region13: #{tpu_custom_call.1} parent=1 // pred_fallthru
      _
    %51 = vsyncpa [#allocation3], 1

</llo_original>
